<compile_context>
chip_gen: v6e
topology: v6e:2x2x1
jax: 0.10.0
libtpu: 0.0.40
codegen_flags: <defaults>
</compile_context>

<pallas_src>
import jax
import jax.numpy as jnp
from jax.experimental import pallas as pl
from jax.experimental.pallas import tpu as pltpu


def _gather_scale_kernel(xg0_ref, wsum_ref, o_ref):
    # xg0_ref:  (bb, E, K)    f32  X[b, ind[b,e,k], 0]      (VMEM)
    # wsum_ref: (E, J)        f32  sum_i W[e, i, :]         (VMEM, grid-resident)
    # o_ref:    (bb, E, K*J)  f32  lane-dense output slab   (VMEM)
    bb, E, K = xg0_ref.shape
    J = wsum_ref.shape[-1]
    wsum = wsum_ref[...]                                     # (E, J)

    # Y[b, e, k*J + j] = xg0[b, e, k] * wsum[e, j].
    # Static unroll over K: each step loads a 1-lane slice of xg0, broadcasts
    # it across J lanes (VPU multiply) and stores a static J-wide slice into
    # the lane-dense output block.  No in-kernel reshape / relayout of an
    # output-sized array; the HBM writeback of the (E, K*J) block is dense.
    # TODO(synk): for production-sized K, tile K through the grid instead of
    # fully unrolling this loop.
    for k in range(K):
        o_ref[:, :, k * J:(k + 1) * J] = (
            xg0_ref[:, :, k:k + 1] * wsum).astype(o_ref.dtype)


def torch_gather_einsum(X, ind, W, *, min_slab_bytes=128 * 1024):
    """Pallas implementation of TorchGatherEinsum.forward -> (B, E, K, J)."""
    B, T, I = X.shape
    Bi, E, K = ind.shape
    Ew, Iw, J = W.shape
    assert Bi == B and Ew == E and Iw == I
    KJ = K * J

    # Algebraic collapse (see header): only column 0 of X is used and the
    # singleton 'i' broadcasts against W, so contract W over I up front and
    # gather the B*E*K scalars of X outside the kernel (tiny XLA gather).
    wsum = jnp.sum(W.astype(jnp.float32), axis=1)                     # (E, J)
    x0 = X[:, :, 0].astype(jnp.float32)                               # (B, T)
    xg0 = x0[jnp.arange(B)[:, None, None], ind]                       # (B, E, K)

    # Grid sizing: fold B into one block when the per-batch output slab is
    # small (demo shapes); otherwise one parallel grid step per batch element.
    # TODO(synk): for production shapes additionally tile E (and K) through
    # the grid, index wsum by the E-tile, and cap output blocks at ~12-16 MiB
    # per buffer for v7x's 64 MiB VMEM.
    slab_bytes = E * KJ * 4
    if B > 1 and slab_bytes >= min_slab_bytes:
        bb = 1
        dim_sems = ("parallel",)          # v7x: one step per TensorCore
    else:
        bb = B                            # v5e/v6e: avoid tiny per-step blocks
        dim_sems = ("arbitrary",)
    grid = (B // bb,)

    vmem_bytes = 4 * (2 * bb * E * K + 2 * bb * E * KJ + 2 * E * J) + (1 << 20)
    vmem_bytes = int(min(max(vmem_bytes, 8 << 20), 48 << 20))

    cost = pl.CostEstimate(
        flops=B * E * KJ,
        transcendentals=0,
        bytes_accessed=4 * (B * E * KJ + B * E * K + E * J),
    )

    out_flat = pl.pallas_call(
        _gather_scale_kernel,
        out_shape=jax.ShapeDtypeStruct((B, E, KJ), jnp.float32),
        grid=grid,
        in_specs=[
            pl.BlockSpec((bb, E, K), lambda b: (b, 0, 0)),    # xg0 batch slab
            pl.BlockSpec((E, J), lambda b: (0, 0)),           # wsum (resident)
        ],
        out_specs=pl.BlockSpec((bb, E, KJ), lambda b: (b, 0, 0)),
        compiler_params=pltpu.CompilerParams(
            dimension_semantics=dim_sems,
            vmem_limit_bytes=vmem_bytes,
        ),
        cost_estimate=cost,
    )(xg0, wsum)

    # Free (contiguous) reshape back to the module's output shape.
    return out_flat.reshape(B, E, K, J)


def _reference(X, ind, W):
    """Pure-JAX transcription of the literal PyTorch forward (full-I einsum)."""
    B, T, I = X.shape
    _, E, K = ind.shape
    # torch.gather(X.expand(B,E,T,I), 2, ind[...,None]) -> (B, E, K, 1),
    # i.e. X[b, ind[b,e,k], 0].
    xg0 = X[jnp.arange(B)[:, None, None], ind, 0]             # (B, E, K)
    # torch.einsum broadcasts the singleton 'i' of the gathered tensor.
    xg = jnp.broadcast_to(xg0[..., None], (B, E, K, I))       # (B, E, K, I)
    return jnp.einsum('beki,eij->bekj', xg, W,
                      precision=jax.lax.Precision.HIGHEST)


if __name__ == "__main__":
    # Small deterministic shapes consistent with the module.
    B, T, I = 2, 16, 32     # batch, seq, in-features
    E, K, J = 4, 8, 32      # experts, gathered tokens per expert, out-features

    key = jax.random.PRNGKey(0)
    kx, ki, kw = jax.random.split(key, 3)

    X = jax.random.normal(kx, (B, T, I), dtype=jnp.float32)
    ind = jax.random.randint(ki, (B, E, K), 0, T, dtype=jnp.int32)
    # nn.Parameter(torch.rand(E, I, J)) -> uniform [0, 1)
    W = jax.random.uniform(kw, (E, I, J), dtype=jnp.float32)

    y = jax.block_until_ready(torch_gather_einsum(X, ind, W))

    y_ref = _reference(X, ind, W)
    assert y.shape == (B, E, K, J)
    assert y.dtype == jnp.float32
    assert jnp.allclose(y, y_ref, rtol=1e-5, atol=1e-5), "mismatch vs reference"

    print("KERNEL_OK")
</pallas_src>

<mosaic_0001>
module attributes {stable_mosaic.version = 11 : i64} {
  func.func @_gather_scale_kernel(%arg0: i32, %arg1: memref<2x4x8xf32, #tpu.memory_space<vmem>>, %arg2: memref<4x32xf32, #tpu.memory_space<vmem>>, %arg3: memref<2x4x256xf32, #tpu.memory_space<vmem>>) attributes {dimension_semantics = [#tpu.dimension_semantics<arbitrary>], iteration_bounds = array<i64: 1>, scalar_prefetch = 0 : i64, scratch_operands = 0 : i64, tpu.core_type = #tpu.core_type<tc>, window_params = [{transform_indices = @transform_0, window_bounds = array<i64: 2, 4, 8>}, {pipeline_mode = #tpu.pipeline_mode<synchronous>, transform_indices = @transform_1, window_bounds = array<i64: 4, 32>}, {transform_indices = @transform_2, window_bounds = array<i64: 2, 4, 256>}]} {
    %c0 = arith.constant 0 : index
    %c0_0 = arith.constant 0 : index
    %0 = vector.load %arg2[%c0, %c0_0] : memref<4x32xf32, #tpu.memory_space<vmem>>, vector<4x32xf32>
    %c0_1 = arith.constant 0 : index
    %c0_2 = arith.constant 0 : index
    %c0_3 = arith.constant 0 : index
    %1 = vector.load %arg1[%c0_1, %c0_2, %c0_3] : memref<2x4x8xf32, #tpu.memory_space<vmem>>, vector<2x4x1xf32>
    %2 = vector.shape_cast %0 : vector<4x32xf32> to vector<1x4x32xf32>
    %3 = vector.broadcast %1 : vector<2x4x1xf32> to vector<2x4x32xf32>
    %4 = vector.broadcast %2 : vector<1x4x32xf32> to vector<2x4x32xf32>
    %5 = arith.mulf %3, %4 : vector<2x4x32xf32>
    %c0_4 = arith.constant 0 : index
    %c0_5 = arith.constant 0 : index
    %c0_6 = arith.constant 0 : index
    %6 = vector.load %arg3[%c0_4, %c0_5, %c0_6] : memref<2x4x256xf32, #tpu.memory_space<vmem>>, vector<2x4x32xf32>
    tpu.vector_store %arg3[%c0_4, %c0_5, %c0_6], %5 {strides = array<i32>} : memref<2x4x256xf32, #tpu.memory_space<vmem>>, vector<2x4x32xf32>,
    %c0_7 = arith.constant 0 : index
    %c0_8 = arith.constant 0 : index
    %c1 = arith.constant 1 : index
    %7 = vector.load %arg1[%c0_7, %c0_8, %c1] : memref<2x4x8xf32, #tpu.memory_space<vmem>>, vector<2x4x1xf32>
    %8 = vector.shape_cast %0 : vector<4x32xf32> to vector<1x4x32xf32>
    %9 = vector.broadcast %7 : vector<2x4x1xf32> to vector<2x4x32xf32>
    %10 = vector.broadcast %8 : vector<1x4x32xf32> to vector<2x4x32xf32>
    %11 = arith.mulf %9, %10 : vector<2x4x32xf32>
    %c0_9 = arith.constant 0 : index
    %c0_10 = arith.constant 0 : index
    %c32 = arith.constant 32 : index
    %12 = vector.load %arg3[%c0_9, %c0_10, %c32] : memref<2x4x256xf32, #tpu.memory_space<vmem>>, vector<2x4x32xf32>
    tpu.vector_store %arg3[%c0_9, %c0_10, %c32], %11 {strides = array<i32>} : memref<2x4x256xf32, #tpu.memory_space<vmem>>, vector<2x4x32xf32>,
    %c0_11 = arith.constant 0 : index
    %c0_12 = arith.constant 0 : index
    %c2 = arith.constant 2 : index
    %13 = vector.load %arg1[%c0_11, %c0_12, %c2] : memref<2x4x8xf32, #tpu.memory_space<vmem>>, vector<2x4x1xf32>
    %14 = vector.shape_cast %0 : vector<4x32xf32> to vector<1x4x32xf32>
    %15 = vector.broadcast %13 : vector<2x4x1xf32> to vector<2x4x32xf32>
    %16 = vector.broadcast %14 : vector<1x4x32xf32> to vector<2x4x32xf32>
    %17 = arith.mulf %15, %16 : vector<2x4x32xf32>
    %c0_13 = arith.constant 0 : index
    %c0_14 = arith.constant 0 : index
    %c64 = arith.constant 64 : index
    %18 = vector.load %arg3[%c0_13, %c0_14, %c64] : memref<2x4x256xf32, #tpu.memory_space<vmem>>, vector<2x4x32xf32>
    tpu.vector_store %arg3[%c0_13, %c0_14, %c64], %17 {strides = array<i32>} : memref<2x4x256xf32, #tpu.memory_space<vmem>>, vector<2x4x32xf32>,
    %c0_15 = arith.constant 0 : index
    %c0_16 = arith.constant 0 : index
    %c3 = arith.constant 3 : index
    %19 = vector.load %arg1[%c0_15, %c0_16, %c3] : memref<2x4x8xf32, #tpu.memory_space<vmem>>, vector<2x4x1xf32>
    %20 = vector.shape_cast %0 : vector<4x32xf32> to vector<1x4x32xf32>
    %21 = vector.broadcast %19 : vector<2x4x1xf32> to vector<2x4x32xf32>
    %22 = vector.broadcast %20 : vector<1x4x32xf32> to vector<2x4x32xf32>
    %23 = arith.mulf %21, %22 : vector<2x4x32xf32>
    %c0_17 = arith.constant 0 : index
    %c0_18 = arith.constant 0 : index
    %c96 = arith.constant 96 : index
    %24 = vector.load %arg3[%c0_17, %c0_18, %c96] : memref<2x4x256xf32, #tpu.memory_space<vmem>>, vector<2x4x32xf32>
    tpu.vector_store %arg3[%c0_17, %c0_18, %c96], %23 {strides = array<i32>} : memref<2x4x256xf32, #tpu.memory_space<vmem>>, vector<2x4x32xf32>,
    %c0_19 = arith.constant 0 : index
    %c0_20 = arith.constant 0 : index
    %c4 = arith.constant 4 : index
    %25 = vector.load %arg1[%c0_19, %c0_20, %c4] : memref<2x4x8xf32, #tpu.memory_space<vmem>>, vector<2x4x1xf32>
    %26 = vector.shape_cast %0 : vector<4x32xf32> to vector<1x4x32xf32>
    %27 = vector.broadcast %25 : vector<2x4x1xf32> to vector<2x4x32xf32>
    %28 = vector.broadcast %26 : vector<1x4x32xf32> to vector<2x4x32xf32>
    %29 = arith.mulf %27, %28 : vector<2x4x32xf32>
    %c0_21 = arith.constant 0 : index
    %c0_22 = arith.constant 0 : index
    %c128 = arith.constant 128 : index
    %30 = vector.load %arg3[%c0_21, %c0_22, %c128] : memref<2x4x256xf32, #tpu.memory_space<vmem>>, vector<2x4x32xf32>
    tpu.vector_store %arg3[%c0_21, %c0_22, %c128], %29 {strides = array<i32>} : memref<2x4x256xf32, #tpu.memory_space<vmem>>, vector<2x4x32xf32>,
    %c0_23 = arith.constant 0 : index
    %c0_24 = arith.constant 0 : index
    %c5 = arith.constant 5 : index
    %31 = vector.load %arg1[%c0_23, %c0_24, %c5] : memref<2x4x8xf32, #tpu.memory_space<vmem>>, vector<2x4x1xf32>
    %32 = vector.shape_cast %0 : vector<4x32xf32> to vector<1x4x32xf32>
    %33 = vector.broadcast %31 : vector<2x4x1xf32> to vector<2x4x32xf32>
    %34 = vector.broadcast %32 : vector<1x4x32xf32> to vector<2x4x32xf32>
    %35 = arith.mulf %33, %34 : vector<2x4x32xf32>
    %c0_25 = arith.constant 0 : index
    %c0_26 = arith.constant 0 : index
    %c160 = arith.constant 160 : index
    %36 = vector.load %arg3[%c0_25, %c0_26, %c160] : memref<2x4x256xf32, #tpu.memory_space<vmem>>, vector<2x4x32xf32>
    tpu.vector_store %arg3[%c0_25, %c0_26, %c160], %35 {strides = array<i32>} : memref<2x4x256xf32, #tpu.memory_space<vmem>>, vector<2x4x32xf32>,
    %c0_27 = arith.constant 0 : index
    %c0_28 = arith.constant 0 : index
    %c6 = arith.constant 6 : index
    %37 = vector.load %arg1[%c0_27, %c0_28, %c6] : memref<2x4x8xf32, #tpu.memory_space<vmem>>, vector<2x4x1xf32>
    %38 = vector.shape_cast %0 : vector<4x32xf32> to vector<1x4x32xf32>
    %39 = vector.broadcast %37 : vector<2x4x1xf32> to vector<2x4x32xf32>
    %40 = vector.broadcast %38 : vector<1x4x32xf32> to vector<2x4x32xf32>
    %41 = arith.mulf %39, %40 : vector<2x4x32xf32>
    %c0_29 = arith.constant 0 : index
    %c0_30 = arith.constant 0 : index
    %c192 = arith.constant 192 : index
    %42 = vector.load %arg3[%c0_29, %c0_30, %c192] : memref<2x4x256xf32, #tpu.memory_space<vmem>>, vector<2x4x32xf32>
    tpu.vector_store %arg3[%c0_29, %c0_30, %c192], %41 {strides = array<i32>} : memref<2x4x256xf32, #tpu.memory_space<vmem>>, vector<2x4x32xf32>,
    %c0_31 = arith.constant 0 : index
    %c0_32 = arith.constant 0 : index
    %c7 = arith.constant 7 : index
    %43 = vector.load %arg1[%c0_31, %c0_32, %c7] : memref<2x4x8xf32, #tpu.memory_space<vmem>>, vector<2x4x1xf32>
    %44 = vector.shape_cast %0 : vector<4x32xf32> to vector<1x4x32xf32>
    %45 = vector.broadcast %43 : vector<2x4x1xf32> to vector<2x4x32xf32>
    %46 = vector.broadcast %44 : vector<1x4x32xf32> to vector<2x4x32xf32>
    %47 = arith.mulf %45, %46 : vector<2x4x32xf32>
    %c0_33 = arith.constant 0 : index
    %c0_34 = arith.constant 0 : index
    %c224 = arith.constant 224 : index
    %48 = vector.load %arg3[%c0_33, %c0_34, %c224] : memref<2x4x256xf32, #tpu.memory_space<vmem>>, vector<2x4x32xf32>
    tpu.vector_store %arg3[%c0_33, %c0_34, %c224], %47 {strides = array<i32>} : memref<2x4x256xf32, #tpu.memory_space<vmem>>, vector<2x4x32xf32>,
    return
  }
  func.func @transform_0(%arg0: i32) -> (i32, i32, i32) {
    %c0_i32 = arith.constant 0 : i32
    %c0_i32_0 = arith.constant 0 : i32
    %c0_i32_1 = arith.constant 0 : i32
    return %arg0, %c0_i32, %c0_i32_0 : i32, i32, i32
  }
  func.func @transform_1(%arg0: i32) -> (i32, i32) {
    %c0_i32 = arith.constant 0 : i32
    %c0_i32_0 = arith.constant 0 : i32
    %c0_i32_1 = arith.constant 0 : i32
    return %c0_i32, %c0_i32_0 : i32, i32
  }
  func.func @transform_2(%arg0: i32) -> (i32, i32, i32) {
    %c0_i32 = arith.constant 0 : i32
    %c0_i32_0 = arith.constant 0 : i32
    %c0_i32_1 = arith.constant 0 : i32
    return %arg0, %c0_i32, %c0_i32_0 : i32, i32, i32
  }
}

</mosaic_0001>

<llo_original>
// kernel: tpu_custom_call.1
$region0: #{tpu_custom_call.1}
  #allocation0 [shape = 'u32[]', space=smem, size = 0x4, offset = 0x4, fixed_abs, tag = 'smem constant byte address 0x4 - core index']
  #allocation1 [shape = 'u32[144,128]{1,0:T(1,128)}', space=vmem, size = 0x12000, scoped, tag = 'internal scratch']
  %s0 = inlined_call_operand.hbm [shape: f32[2,4,8], index: 0, kind: input, shape index: {}]
  %s1 = inlined_call_operand.hbm [shape: f32[4,32], index: 1, kind: input, shape index: {}]
  %s2 = inlined_call_operand.hbm [shape: f32[2,4,256], index: 2, kind: output, shape index: {}]
  %s3 = sld [smem:[#allocation0]]
  $region26: #{tpu_custom_call.1} parent=0
    _
  %s5 = ssub.s32 1, %s3
  %s6 = scalar_select 0, %s5, %s3
  $region1: #{tpu_custom_call.1} parent=0
    #allocation2 [shape = 'u8[4096]{0}', space=vmem, size = 0x1000, scoped, tag = 'input window, operand 0, single buffered']
    #allocation3 [shape = 's32[1]{0}', space=sflag, size = 0x4, scoped, tag = 'scoped memory for tpu_custom_call.1']
    #allocation4 [shape = 's32[1]{0}', space=sflag, size = 0x4, scoped, tag = 'scoped memory for tpu_custom_call.1']
    #allocation5 [shape = 'u8[2048]{0}', space=vmem, size = 0x800, scoped, tag = 'input window, operand 1, single buffered']
    #allocation6 [shape = 's32[1]{0}', space=sflag, size = 0x4, scoped, tag = 'scoped memory for tpu_custom_call.1']
    #allocation7 [shape = 'u8[8192]{0}', space=vmem, size = 0x2000, scoped, tag = 'output window, operand 0, single buffered']
    %7 = vsyncpa [#allocation3], 0
    %8 = vsyncpa [#allocation6], 0
    %9 = vsyncpa [#allocation4], 0
    // Predicated region
    $region2: #{tpu_custom_call.1} parent=1 // pred_check
      _
    $region3: #{tpu_custom_call.1} parent=1 // pred_check_branch
      %11 = sbr.rel (0) target = $region5
    $region4: #{tpu_custom_call.1} parent=1 // pred_region
      %s13 = ssub.s32 128, 128
      %14 = vsyncadd [#allocation3], %s13
      %s15 = sshll.u32 [#allocation2], 4
      %s16 = int_to_ptr.vmem [resolvable:$true] %s15
      %21 = dma.hbm_to_vmem [thread:$0]  %s0, 128, %s16, [#allocation3], 64, 64, 4
    $region5: #{tpu_custom_call.1} parent=1 // pred_fallthru
      _
    // Predicated region
    $region6: #{tpu_custom_call.1} parent=1 // pred_check
      _
    $region7: #{tpu_custom_call.1} parent=1 // pred_check_branch
      %23 = sbr.rel (0) target = $region9
    $region8: #{tpu_custom_call.1} parent=1 // pred_region
      %s25 = ssub.s32 64, 64
      %26 = vsyncadd [#allocation6], %s25
      %s28 = sshll.u32 [#allocation5], 4
      %s29 = int_to_ptr.vmem [resolvable:$true] %s28
      %31 = dma.hbm_to_vmem [thread:$0]  %s1, 64, %s29, [#allocation6]
    $region9: #{tpu_custom_call.1} parent=1 // pred_fallthru
      _
    // Predicated region
    $region10: #{tpu_custom_call.1} parent=1 // pred_check
      _
    $region11: #{tpu_custom_call.1} parent=1 // pred_check_branch
      %33 = sbr.rel (0) target = $region13
    $region12: #{tpu_custom_call.1} parent=1 // pred_region
      %34 = dma.done [#allocation3], 128
    $region13: #{tpu_custom_call.1} parent=1 // pred_fallthru
      _
    // Predicated region
    $region14: #{tpu_custom_call.1} parent=1 // pred_check
      _
    $region15: #{tpu_custom_call.1} parent=1 // pred_check_branch
      %36 = sbr.rel (0) target = $region17
    $region16: #{tpu_custom_call.1} parent=1 // pred_region
      %37 = dma.done [#allocation6], 64
    $region17: #{tpu_custom_call.1} parent=1 // pred_fallthru
      _
    %v38 = vld [vmem:[#allocation5] sm:$0xf]
    %v39 = vld [vmem:[#allocation2] sm:$0xf]
    %v40 = vld [vmem:[#allocation2 + $0x4] sm:$0xf]
    %42 = vset.pattern.permute.xlu0 0
    %43 = vperm.xlu0 %42, %v39
    %v44 = vpop.permute.xlu0 %43
    %47 = vset.pattern.permute.xlu0 0
    %48 = vperm.xlu0 %47, %v40
    %v49 = vpop.permute.xlu0 %48
    %v51 = vmul.f32 %v44, %v38
    %v52 = vmul.f32 %v49, %v38
    %vm53 = vcmask 257024
    %54 = vst.msk [vmem:[#allocation7] sm:$0xf] %vm53, %v51
    %55 = vst.msk [vmem:[#allocation7 + $0x8] sm:$0xf] %vm53, %v52
    %v56 = vld [vmem:[#allocation2] sm:$0xf]
    %v57 = vld [vmem:[#allocation2 + $0x4] sm:$0xf]
    %59 = vset.pattern.permute.xlu0 1
    %60 = vperm.xlu0 %59, %v56
    %v61 = vpop.permute.xlu0 %60
    %64 = vset.pattern.permute.xlu0 1
    %65 = vperm.xlu0 %64, %v57
    %v66 = vpop.permute.xlu0 %65
    %v68 = vmul.f32 %v61, %v38
    %v69 = vmul.f32 %v66, %v38
    %72 = vrot.lane.b32.xlu0 %v68, 32
    %v73 = vpop.permute.xlu0 %72
    %74 = vrot.lane.b32.xlu0 %v69, 32
    %v75 = vpop.permute.xlu0 %74
    %vm78 = vcmask 519424
    %79 = vst.msk [vmem:[#allocation7] sm:$0xf] %vm78, %v73
    %80 = vst.msk [vmem:[#allocation7 + $0x8] sm:$0xf] %vm78, %v75
    %v81 = vld [vmem:[#allocation2] sm:$0xf]
    %v82 = vld [vmem:[#allocation2 + $0x4] sm:$0xf]
    %84 = vset.pattern.permute.xlu0 2
    %85 = vperm.xlu0 %84, %v81
    %v86 = vpop.permute.xlu0 %85
    %89 = vset.pattern.permute.xlu0 2
    %90 = vperm.xlu0 %89, %v82
    %v91 = vpop.permute.xlu0 %90
    %v93 = vmul.f32 %v86, %v38
    %v94 = vmul.f32 %v91, %v38
    %97 = vrot.lane.b32.xlu0 %v93, 64
    %v98 = vpop.permute.xlu0 %97
    %99 = vrot.lane.b32.xlu0 %v94, 64
    %v100 = vpop.permute.xlu0 %99
    %vm103 = vcmask 781824
    %104 = vst.msk [vmem:[#allocation7] sm:$0xf] %vm103, %v98
    %105 = vst.msk [vmem:[#allocation7 + $0x8] sm:$0xf] %vm103, %v100
    %v106 = vld [vmem:[#allocation2] sm:$0xf]
    %v107 = vld [vmem:[#allocation2 + $0x4] sm:$0xf]
    %109 = vset.pattern.permute.xlu0 3
    %110 = vperm.xlu0 %109, %v106
    %v111 = vpop.permute.xlu0 %110
    %114 = vset.pattern.permute.xlu0 3
    %115 = vperm.xlu0 %114, %v107
    %v116 = vpop.permute.xlu0 %115
    %v118 = vmul.f32 %v111, %v38
    %v119 = vmul.f32 %v116, %v38
    %122 = vrot.lane.b32.xlu0 %v118, 96
    %v123 = vpop.permute.xlu0 %122
    %124 = vrot.lane.b32.xlu0 %v119, 96
    %v125 = vpop.permute.xlu0 %124
    %vm128 = vcmask 1044224
    %129 = vst.msk [vmem:[#allocation7] sm:$0xf] %vm128, %v123
    %130 = vst.msk [vmem:[#allocation7 + $0x8] sm:$0xf] %vm128, %v125
    %v131 = vld [vmem:[#allocation2] sm:$0xf]
    %v132 = vld [vmem:[#allocation2 + $0x4] sm:$0xf]
    %134 = vset.pattern.permute.xlu0 4
    %135 = vperm.xlu0 %134, %v131
    %v136 = vpop.permute.xlu0 %135
    %139 = vset.pattern.permute.xlu0 4
    %140 = vperm.xlu0 %139, %v132
    %v141 = vpop.permute.xlu0 %140
    %v143 = vmul.f32 %v136, %v38
    %v144 = vmul.f32 %v141, %v38
    %145 = vst.msk [vmem:[#allocation7 + $0x4] sm:$0xf] %vm53, %v143
    %146 = vst.msk [vmem:[#allocation7 + $0xc] sm:$0xf] %vm53, %v144
    %v147 = vld [vmem:[#allocation2] sm:$0xf]
    %v148 = vld [vmem:[#allocation2 + $0x4] sm:$0xf]
    %150 = vset.pattern.permute.xlu0 5
    %151 = vperm.xlu0 %150, %v147
    %v152 = vpop.permute.xlu0 %151
    %155 = vset.pattern.permute.xlu0 5
    %156 = vperm.xlu0 %155, %v148
    %v157 = vpop.permute.xlu0 %156
    %v159 = vmul.f32 %v152, %v38
    %v160 = vmul.f32 %v157, %v38
    %163 = vrot.lane.b32.xlu0 %v159, 32
    %v164 = vpop.permute.xlu0 %163
    %165 = vrot.lane.b32.xlu0 %v160, 32
    %v166 = vpop.permute.xlu0 %165
    %169 = vst.msk [vmem:[#allocation7 + $0x4] sm:$0xf] %vm78, %v164
    %170 = vst.msk [vmem:[#allocation7 + $0xc] sm:$0xf] %vm78, %v166
    %v171 = vld [vmem:[#allocation2] sm:$0xf]
    %v172 = vld [vmem:[#allocation2 + $0x4] sm:$0xf]
    %174 = vset.pattern.permute.xlu0 6
    %175 = vperm.xlu0 %174, %v171
    %v176 = vpop.permute.xlu0 %175
    %179 = vset.pattern.permute.xlu0 6
    %180 = vperm.xlu0 %179, %v172
    %v181 = vpop.permute.xlu0 %180
    %v183 = vmul.f32 %v176, %v38
    %v184 = vmul.f32 %v181, %v38
    %187 = vrot.lane.b32.xlu0 %v183, 64
    %v188 = vpop.permute.xlu0 %187
    %189 = vrot.lane.b32.xlu0 %v184, 64
    %v190 = vpop.permute.xlu0 %189
    %193 = vst.msk [vmem:[#allocation7 + $0x4] sm:$0xf] %vm103, %v188
    %194 = vst.msk [vmem:[#allocation7 + $0xc] sm:$0xf] %vm103, %v190
    %v195 = vld [vmem:[#allocation2] sm:$0xf]
    %v196 = vld [vmem:[#allocation2 + $0x4] sm:$0xf]
    %198 = vset.pattern.permute.xlu0 7
    %199 = vperm.xlu0 %198, %v195
    %v200 = vpop.permute.xlu0 %199
    %203 = vset.pattern.permute.xlu0 7
    %204 = vperm.xlu0 %203, %v196
    %v205 = vpop.permute.xlu0 %204
    %v207 = vmul.f32 %v200, %v38
    %v208 = vmul.f32 %v205, %v38
    %211 = vrot.lane.b32.xlu0 %v207, 96
    %v212 = vpop.permute.xlu0 %211
    %213 = vrot.lane.b32.xlu0 %v208, 96
    %v214 = vpop.permute.xlu0 %213
    %217 = vst.msk [vmem:[#allocation7 + $0x4] sm:$0xf] %vm128, %v212
    %218 = vst.msk [vmem:[#allocation7 + $0xc] sm:$0xf] %vm128, %v214
    // Predicated region
    $region18: #{tpu_custom_call.1} parent=1 // pred_check
      _
    $region19: #{tpu_custom_call.1} parent=1 // pred_check_branch
      %220 = sbr.rel (0) target = $region21
    $region20: #{tpu_custom_call.1} parent=1 // pred_region
      %s222 = ssub.s32 256, 256
      %223 = vsyncadd [#allocation4], %s222
      %s224 = sshll.u32 [#allocation7], 4
      %s225 = int_to_ptr.vmem [resolvable:$true] %s224
      %230 = dma.vmem_to_hbm [thread:$0]  %s225, 256, %s2, [#allocation4], 128, 128, 8
    $region21: #{tpu_custom_call.1} parent=1 // pred_fallthru
      _
    // Predicated region
    $region22: #{tpu_custom_call.1} parent=1 // pred_check
      _
    $region23: #{tpu_custom_call.1} parent=1 // pred_check_branch
      %232 = sbr.rel (0) target = $region25
    $region24: #{tpu_custom_call.1} parent=1 // pred_region
      %233 = dma.done [#allocation4], 256
    $region25: #{tpu_custom_call.1} parent=1 // pred_fallthru
      _
    %234 = vsyncpa [#allocation3], 1
    %235 = vsyncpa [#allocation6], 1
    %236 = vsyncpa [#allocation4], 1

</llo_original>
